<compile_context>
chip_gen: v7x
topology: tpu7x:2x2x1
jax: 0.10.0
libtpu: 0.0.40
codegen_flags: <defaults>
</compile_context>

<pallas_src>
import functools

import jax
import jax.numpy as jnp
from jax.experimental import pallas as pl
from jax.experimental.pallas import tpu as pltpu

LEAK = 0.2     # LeakyReLU negative slope
PACK = 8       # batch rows packed into the lane dimension per "super-row"


def _round_up(x, m):
    return (x + m - 1) // m * m


def _lrelu(h):
    return jnp.where(h > 0, h, LEAK * h)


# ---------------------------------------------------------------------------
# Kernel: fused (Linear -> LeakyReLU) x2 -> Linear -> Sigmoid on row-packed data.
# x_ref:   (rows, PACK*in_aug)  -- PACK batch rows per super-row (lane-dense)
# w*_ref:  block-diagonal-replicated weights, b*_ref: lane-tiled biases
# out_ref: (rows, PACK)         -- PACK sigmoid outputs per super-row
# ---------------------------------------------------------------------------
def disc_mlp_kernel(x_ref, w1_ref, b1_ref, w2_ref, b2_ref, w3_ref, b3_ref,
                    out_ref):
    h = jnp.dot(x_ref[...], w1_ref[...],
                preferred_element_type=jnp.float32) + b1_ref[...]
    h = _lrelu(h)                                  # Dropout(0.4) -> identity
    h = jnp.dot(h, w2_ref[...],
                preferred_element_type=jnp.float32) + b2_ref[...]
    h = _lrelu(h)                                  # Dropout(0.4) -> identity
    z = jnp.dot(h, w3_ref[...],
                preferred_element_type=jnp.float32) + b3_ref[...]
    # sigmoid(z) = 1 / (1 + exp(-z)); exp -> EUP slot, approx reciprocal -> vrcp.
    out_ref[...] = pl.reciprocal(1.0 + jnp.exp(-z), approx=True)


# ---------------------------------------------------------------------------
# Parameters (xavier-normal weights, zero biases). Linear-1 is stored split:
# 'w1x' (input_dim rows) and, if conditional, 'w1c' (n_classes rows), matching
# torch.cat([x, one_hot], dim=1) ordering.
# ---------------------------------------------------------------------------
def init_discriminator_params(key, input_dim, hidden_dim, n_classes=None):
    h1, h2 = hidden_dim // 2, hidden_dim // 4
    in0 = input_dim + (n_classes if n_classes is not None else 0)
    dims = [(in0, h1), (h1, h2), (h2, 1)]
    params = {}
    keys = jax.random.split(key, len(dims))
    for i, ((fan_in, fan_out), k) in enumerate(zip(dims, keys), start=1):
        std = (2.0 / (fan_in + fan_out)) ** 0.5
        w = std * jax.random.normal(k, (fan_in, fan_out), jnp.float32)
        if i == 1 and n_classes is not None:
            params["w1x"] = w[:input_dim]
            params["w1c"] = w[input_dim:]
        else:
            params[f"w{i}"] = w
        params[f"b{i}"] = jnp.zeros((1, fan_out), jnp.float32)
    return params


# ---------------------------------------------------------------------------
# Wrapper helpers
# ---------------------------------------------------------------------------
def _block_diag_replicate(w, p=PACK):
    """(k, n) -> (p*k, p*n) block-diagonal with p copies of w."""
    k, n = w.shape
    eye = jnp.eye(p, dtype=w.dtype)
    return (eye[:, None, :, None] * w[None, :, None, :]).reshape(p * k, p * n)


def _augment_inputs(x, labels, params, n_classes):
    """Fold the conditional one-hot into extra input column(s) + bias."""
    if n_classes is None:
        return x, params["w1"], params["b1"]
    if labels is None:
        raise ValueError("labels must be provided for a conditional Discriminator")
    w1x, w1c, b1 = params["w1x"], params["w1c"], params["b1"]
    if labels.ndim == 1 and n_classes == 2:
        # one_hot(l, 2) @ W1c == W1c[0] + l * (W1c[1] - W1c[0]) for l in {0, 1}
        col = labels.astype(jnp.float32)[:, None]
        w1 = jnp.concatenate([w1x, (w1c[1] - w1c[0])[None, :]], axis=0)
        return jnp.concatenate([x, col], axis=1), w1, b1 + w1c[0][None, :]
    # General path: labels already one-hot/soft (B, n_classes) or n_classes != 2.
    oh = (labels.astype(jnp.float32) if labels.ndim == 2 else
          jax.nn.one_hot(labels.astype(jnp.int32), n_classes, dtype=jnp.float32))
    return (jnp.concatenate([x, oh], axis=1),
            jnp.concatenate([w1x, w1c], axis=0), b1)


def _pick_tile(B, tile_b):
    """Batch rows per grid step (multiple of 64 = PACK * 8-sublane rule)."""
    if tile_b is not None:
        return max(64, _round_up(tile_b, 64))
    Bp = _round_up(B, 64)
    if Bp <= 8192:
        return Bp                           # single grid step
    # Large B: ~8K rows/step (few-hundred-KB DMAs) and >=2 steps so v7x can
    # shard the parallel grid axis across both TensorCores.
    return min(8192, _round_up((Bp + 1) // 2, 64))


# ---------------------------------------------------------------------------
# Forward pass
# ---------------------------------------------------------------------------
@functools.partial(jax.jit, static_argnames=("n_classes", "tile_b", "use_pallas"))
def discriminator_forward(x, labels=None, params=None, n_classes=2,
                          tile_b=None, use_pallas=None):
    B = x.shape[0]
    if use_pallas is None:
        use_pallas = B >= 1024       # tiny batches: fused XLA dots win
    if not use_pallas:
        return _reference_forward(x, labels, params, n_classes=n_classes)

    x_aug, w1, b1 = _augment_inputs(x, labels, params, n_classes)
    in_aug = x_aug.shape[1]

    tb = _pick_tile(B, tile_b)
    Bp = _round_up(B, tb)
    if Bp != B:                       # padded rows dropped at the end
        x_aug = jnp.pad(x_aug, ((0, Bp - B), (0, 0)))

    rows = tb // PACK
    xp = x_aug.reshape(Bp // PACK, PACK * in_aug)        # row packing (free reshape)
    w1p, w2p, w3p = (_block_diag_replicate(w)
                     for w in (w1, params["w2"], params["w3"]))
    b1p, b2p, b3p = (jnp.tile(b, (1, PACK))
                     for b in (b1, params["b2"], params["b3"]))
    weights = (w1p, b1p, w2p, b2p, w3p, b3p)

    def resident(a):
        return pl.BlockSpec(a.shape, lambda i: (0, 0))

    # VMEM budget: double-buffered x/out tiles (lane/sublane padded) + weights.
    lpad = lambda n: _round_up(n, 128)
    spad = lambda n: _round_up(n, 8)
    vmem_need = (2 * spad(rows) * lpad(PACK * in_aug) * 4
                 + 2 * spad(rows) * lpad(PACK) * 4
                 + 2 * sum(spad(a.shape[0]) * lpad(a.shape[1]) * 4 for a in weights)
                 + (2 << 20))
    vmem_limit = int(max(32 << 20, min(vmem_need, 96 << 20)))

    out = pl.pallas_call(
        disc_mlp_kernel,
        out_shape=jax.ShapeDtypeStruct((Bp // PACK, PACK), jnp.float32),
        grid=(Bp // tb,),
        in_specs=[pl.BlockSpec((rows, PACK * in_aug), lambda i: (i, 0))]
                 + [resident(a) for a in weights],
        out_specs=pl.BlockSpec((rows, PACK), lambda i: (i, 0)),
        compiler_params=pltpu.CompilerParams(
            dimension_semantics=("parallel",),
            vmem_limit_bytes=vmem_limit),
    )(xp, *weights)
    return out.reshape(Bp, 1)[:B]


def _reference_forward(x, labels, params, n_classes=2):
    """Pure-JAX reference (eval-mode PyTorch semantics)."""
    if n_classes is not None:
        if labels is None:
            raise ValueError("labels must be provided for a conditional Discriminator")
        oh = (labels.astype(jnp.float32) if labels.ndim == 2 else
              jax.nn.one_hot(labels.astype(jnp.int32), n_classes, dtype=jnp.float32))
        x = jnp.concatenate([x, oh], axis=1)
        w1 = jnp.concatenate([params["w1x"], params["w1c"]], axis=0)
    else:
        w1 = params["w1"]
    h = _lrelu(x @ w1 + params["b1"])
    h = _lrelu(h @ params["w2"] + params["b2"])
    return jax.nn.sigmoid(h @ params["w3"] + params["b3"])


if __name__ == "__main__":
    input_dim, hidden_dim, n_classes = 16, 32, 2
    key = jax.random.PRNGKey(0)
    k_param, k_x, k_lbl, k_x2, k_lbl2 = jax.random.split(key, 5)

    params = init_discriminator_params(k_param, input_dim, hidden_dim, n_classes)

    # Tolerances are loosened slightly because of the approximate reciprocal in
    # the in-kernel sigmoid; real bugs show up at the 1e-1 scale here.
    TOL = dict(atol=5e-3, rtol=5e-3)

    # 1) Small-shape conditional check (force the Pallas path; grid = 1 step).
    batch = 8
    x = jax.random.normal(k_x, (batch, input_dim), jnp.float32)
    labels = jax.random.randint(k_lbl, (batch,), 0, n_classes)
    out = jax.block_until_ready(
        discriminator_forward(x, labels, params, n_classes=n_classes,
                              use_pallas=True))
    ref = _reference_forward(x, labels, params, n_classes=n_classes)
    assert out.shape == (batch, 1), out.shape
    assert jnp.allclose(out, ref, **TOL), "conditional mismatch vs reference"

    # 2) Multi-tile grid check (2048 rows, 512-row tiles -> grid = 4 steps).
    batch2 = 2048
    x2 = jax.random.normal(k_x2, (batch2, input_dim), jnp.float32)
    labels2 = jax.random.randint(k_lbl2, (batch2,), 0, n_classes)
    out2 = jax.block_until_ready(
        discriminator_forward(x2, labels2, params, n_classes=n_classes,
                              tile_b=512, use_pallas=True))
    ref2 = _reference_forward(x2, labels2, params, n_classes=n_classes)
    assert out2.shape == (batch2, 1), out2.shape
    assert jnp.allclose(out2, ref2, **TOL), "multi-tile mismatch vs reference"

    # 3) Unconditional variant (n_classes=None).
    params_u = init_discriminator_params(k_param, input_dim, hidden_dim, None)
    out_u = jax.block_until_ready(
        discriminator_forward(x, None, params_u, n_classes=None,
                              use_pallas=True))
    ref_u = _reference_forward(x, None, params_u, n_classes=None)
    assert out_u.shape == (batch, 1), out_u.shape
    assert jnp.allclose(out_u, ref_u, **TOL), "unconditional mismatch vs reference"

    print("KERNEL_OK")
</pallas_src>

<mosaic_0001>
module attributes {stable_mosaic.version = 11 : i64} {
  func.func @disc_mlp_kernel(%arg0: i32, %arg1: memref<8x136xf32, #tpu.memory_space<vmem>>, %arg2: memref<136x128xf32, #tpu.memory_space<vmem>>, %arg3: memref<1x128xf32, #tpu.memory_space<vmem>>, %arg4: memref<128x64xf32, #tpu.memory_space<vmem>>, %arg5: memref<1x64xf32, #tpu.memory_space<vmem>>, %arg6: memref<64x8xf32, #tpu.memory_space<vmem>>, %arg7: memref<1x8xf32, #tpu.memory_space<vmem>>, %arg8: memref<8x8xf32, #tpu.memory_space<vmem>>) attributes {dimension_semantics = [#tpu.dimension_semantics<parallel>], iteration_bounds = array<i64: 1>, scalar_prefetch = 0 : i64, scratch_operands = 0 : i64, tpu.core_type = #tpu.core_type<tc>, window_params = [{transform_indices = @transform_0, window_bounds = array<i64: 8, 136>}, {pipeline_mode = #tpu.pipeline_mode<synchronous>, transform_indices = @transform_1, window_bounds = array<i64: 136, 128>}, {pipeline_mode = #tpu.pipeline_mode<synchronous>, transform_indices = @transform_2, window_bounds = array<i64: 1, 128>}, {pipeline_mode = #tpu.pipeline_mode<synchronous>, transform_indices = @transform_3, window_bounds = array<i64: 128, 64>}, {pipeline_mode = #tpu.pipeline_mode<synchronous>, transform_indices = @transform_4, window_bounds = array<i64: 1, 64>}, {pipeline_mode = #tpu.pipeline_mode<synchronous>, transform_indices = @transform_5, window_bounds = array<i64: 64, 8>}, {pipeline_mode = #tpu.pipeline_mode<synchronous>, transform_indices = @transform_6, window_bounds = array<i64: 1, 8>}, {transform_indices = @transform_7, window_bounds = array<i64: 8, 8>}]} {
    %c0 = arith.constant 0 : index
    %c0_0 = arith.constant 0 : index
    %0 = vector.load %arg1[%c0, %c0_0] : memref<8x136xf32, #tpu.memory_space<vmem>>, vector<8x136xf32>
    %c0_1 = arith.constant 0 : index
    %c0_2 = arith.constant 0 : index
    %1 = vector.load %arg2[%c0_1, %c0_2] : memref<136x128xf32, #tpu.memory_space<vmem>>, vector<136x128xf32>
    %cst = arith.constant dense<0.000000e+00> : vector<8x128xf32>
    %2 = tpu.matmul %0, %1, %cst {dimension_numbers = #tpu.dot_dimension_numbers<[1], [0], [0], [1], [0, 0, 1, 1], [], []>} : vector<8x136xf32>, vector<136x128xf32>, vector<8x128xf32> -> vector<8x128xf32>
    %c0_3 = arith.constant 0 : index
    %c0_4 = arith.constant 0 : index
    %3 = vector.load %arg3[%c0_3, %c0_4] : memref<1x128xf32, #tpu.memory_space<vmem>>, vector<1x128xf32>
    %4 = vector.broadcast %3 : vector<1x128xf32> to vector<8x128xf32>
    %5 = arith.addf %2, %4 : vector<8x128xf32>
    %cst_5 = arith.constant 0.000000e+00 : f32
    %6 = vector.broadcast %cst_5 : f32 to vector<8x128xf32>
    %7 = arith.cmpf ogt, %5, %6 : vector<8x128xf32>
    %cst_6 = arith.constant 2.000000e-01 : f32
    %8 = vector.broadcast %cst_6 : f32 to vector<8x128xf32>
    %9 = arith.mulf %8, %5 : vector<8x128xf32>
    %10 = arith.select %7, %5, %9 : vector<8x128xi1>, vector<8x128xf32>
    %c0_7 = arith.constant 0 : index
    %c0_8 = arith.constant 0 : index
    %11 = vector.load %arg4[%c0_7, %c0_8] : memref<128x64xf32, #tpu.memory_space<vmem>>, vector<128x64xf32>
    %cst_9 = arith.constant dense<0.000000e+00> : vector<8x64xf32>
    %12 = tpu.matmul %10, %11, %cst_9 {dimension_numbers = #tpu.dot_dimension_numbers<[1], [0], [0], [1], [0, 0, 1, 1], [], []>} : vector<8x128xf32>, vector<128x64xf32>, vector<8x64xf32> -> vector<8x64xf32>
    %c0_10 = arith.constant 0 : index
    %c0_11 = arith.constant 0 : index
    %13 = vector.load %arg5[%c0_10, %c0_11] : memref<1x64xf32, #tpu.memory_space<vmem>>, vector<1x64xf32>
    %14 = vector.broadcast %13 : vector<1x64xf32> to vector<8x64xf32>
    %15 = arith.addf %12, %14 : vector<8x64xf32>
    %cst_12 = arith.constant 0.000000e+00 : f32
    %16 = vector.broadcast %cst_12 : f32 to vector<8x64xf32>
    %17 = arith.cmpf ogt, %15, %16 : vector<8x64xf32>
    %cst_13 = arith.constant 2.000000e-01 : f32
    %18 = vector.broadcast %cst_13 : f32 to vector<8x64xf32>
    %19 = arith.mulf %18, %15 : vector<8x64xf32>
    %20 = arith.select %17, %15, %19 : vector<8x64xi1>, vector<8x64xf32>
    %c0_14 = arith.constant 0 : index
    %c0_15 = arith.constant 0 : index
    %21 = vector.load %arg6[%c0_14, %c0_15] : memref<64x8xf32, #tpu.memory_space<vmem>>, vector<64x8xf32>
    %cst_16 = arith.constant dense<0.000000e+00> : vector<8x8xf32>
    %22 = tpu.matmul %20, %21, %cst_16 {dimension_numbers = #tpu.dot_dimension_numbers<[1], [0], [0], [1], [0, 0, 1, 1], [], []>} : vector<8x64xf32>, vector<64x8xf32>, vector<8x8xf32> -> vector<8x8xf32>
    %c0_17 = arith.constant 0 : index
    %c0_18 = arith.constant 0 : index
    %23 = vector.load %arg7[%c0_17, %c0_18] : memref<1x8xf32, #tpu.memory_space<vmem>>, vector<1x8xf32>
    %24 = vector.broadcast %23 : vector<1x8xf32> to vector<8x8xf32>
    %25 = arith.addf %22, %24 : vector<8x8xf32>
    %cst_19 = arith.constant 0.000000e+00 : f32
    %26 = vector.broadcast %cst_19 : f32 to vector<8x8xf32>
    %27 = arith.subf %26, %25 : vector<8x8xf32>
    %28 = math.exp %27 : vector<8x8xf32>
    %cst_20 = arith.constant 1.000000e+00 : f32
    %29 = vector.broadcast %cst_20 : f32 to vector<8x8xf32>
    %30 = arith.addf %29, %28 : vector<8x8xf32>
    %31 = tpu.reciprocal %30 {approx = true} : vector<8x8xf32> -> vector<8x8xf32>
    %c0_21 = arith.constant 0 : index
    %c0_22 = arith.constant 0 : index
    %32 = vector.load %arg8[%c0_21, %c0_22] : memref<8x8xf32, #tpu.memory_space<vmem>>, vector<8x8xf32>
    tpu.vector_store %arg8[%c0_21, %c0_22], %31 {strides = array<i32>} : memref<8x8xf32, #tpu.memory_space<vmem>>, vector<8x8xf32>,
    return
  }
  func.func @transform_0(%arg0: i32) -> (i32, i32) {
    %c0_i32 = arith.constant 0 : i32
    %c0_i32_0 = arith.constant 0 : i32
    return %arg0, %c0_i32 : i32, i32
  }
  func.func @transform_1(%arg0: i32) -> (i32, i32) {
    %c0_i32 = arith.constant 0 : i32
    %c0_i32_0 = arith.constant 0 : i32
    %c0_i32_1 = arith.constant 0 : i32
    return %c0_i32, %c0_i32_0 : i32, i32
  }
  func.func @transform_2(%arg0: i32) -> (i32, i32) {
    %c0_i32 = arith.constant 0 : i32
    %c0_i32_0 = arith.constant 0 : i32
    %c0_i32_1 = arith.constant 0 : i32
    return %c0_i32, %c0_i32_0 : i32, i32
  }
  func.func @transform_3(%arg0: i32) -> (i32, i32) {
    %c0_i32 = arith.constant 0 : i32
    %c0_i32_0 = arith.constant 0 : i32
    %c0_i32_1 = arith.constant 0 : i32
    return %c0_i32, %c0_i32_0 : i32, i32
  }
  func.func @transform_4(%arg0: i32) -> (i32, i32) {
    %c0_i32 = arith.constant 0 : i32
    %c0_i32_0 = arith.constant 0 : i32
    %c0_i32_1 = arith.constant 0 : i32
    return %c0_i32, %c0_i32_0 : i32, i32
  }
  func.func @transform_5(%arg0: i32) -> (i32, i32) {
    %c0_i32 = arith.constant 0 : i32
    %c0_i32_0 = arith.constant 0 : i32
    %c0_i32_1 = arith.constant 0 : i32
    return %c0_i32, %c0_i32_0 : i32, i32
  }
  func.func @transform_6(%arg0: i32) -> (i32, i32) {
    %c0_i32 = arith.constant 0 : i32
    %c0_i32_0 = arith.constant 0 : i32
    %c0_i32_1 = arith.constant 0 : i32
    return %c0_i32, %c0_i32_0 : i32, i32
  }
  func.func @transform_7(%arg0: i32) -> (i32, i32) {
    %c0_i32 = arith.constant 0 : i32
    %c0_i32_0 = arith.constant 0 : i32
    return %arg0, %c0_i32 : i32, i32
  }
}

</mosaic_0001>

<llo_original>
// kernel: discriminator_forward.1
$region0: #{discriminator_forward.1}
  #allocation0 [shape = 'u32[]', space=smem, size = 0x4, offset = 0x4, fixed_abs, tag = 'smem constant byte address 0x4 - core index']
  #allocation1 [shape = 'u32[144,128]{1,0:T(1,128)}', space=vmem, size = 0x12000, scoped, tag = 'internal scratch']
  %s0 = inlined_call_operand.vmem [shape: f32[8,136], index: 0, kind: input, shape index: {}]
  %s1 = inlined_call_operand.vmem [shape: f32[136,128], index: 1, kind: input, shape index: {}]
  %s2 = inlined_call_operand.vmem [shape: f32[1,128], index: 2, kind: input, shape index: {}]
  %s3 = inlined_call_operand.vmem [shape: f32[128,64], index: 3, kind: input, shape index: {}]
  %s4 = inlined_call_operand.vmem [shape: f32[1,64], index: 4, kind: input, shape index: {}]
  %s5 = inlined_call_operand.vmem [shape: f32[64,8], index: 5, kind: input, shape index: {}]
  %s6 = inlined_call_operand.vmem [shape: f32[1,8], index: 6, kind: input, shape index: {}]
  %s7 = inlined_call_operand.vmem [shape: f32[8,8], index: 7, kind: output, shape index: {}]
  %s8 = sld [smem:[#allocation0]]
  $region38: #{discriminator_forward.1} parent=0
    _
  %s10 = ssub.s32 1, %s8
  %s11 = scalar_select 0, %s10, %s8
  // Predicated region
  $region2: #{discriminator_forward.1} parent=0 // pred_check
    _
  $region3: #{discriminator_forward.1} parent=0 // pred_check_branch
    %13 = sbr.rel (0) target = $region5
  $region4: #{discriminator_forward.1} parent=0 // pred_region
    _
  $region5: #{discriminator_forward.1} parent=0 // pred_fallthru
    _
  // Predicated region
  $region6: #{discriminator_forward.1} parent=0 // pred_check
    _
  $region7: #{discriminator_forward.1} parent=0 // pred_check_branch
    %15 = sbr.rel (0) target = $region9
  $region8: #{discriminator_forward.1} parent=0 // pred_region
    _
  $region9: #{discriminator_forward.1} parent=0 // pred_fallthru
    _
  // Predicated region
  $region10: #{discriminator_forward.1} parent=0 // pred_check
    _
  $region11: #{discriminator_forward.1} parent=0 // pred_check_branch
    %17 = sbr.rel (0) target = $region13
  $region12: #{discriminator_forward.1} parent=0 // pred_region
    _
  $region13: #{discriminator_forward.1} parent=0 // pred_fallthru
    _
  // Predicated region
  $region14: #{discriminator_forward.1} parent=0 // pred_check
    _
  $region15: #{discriminator_forward.1} parent=0 // pred_check_branch
    %19 = sbr.rel (0) target = $region17
  $region16: #{discriminator_forward.1} parent=0 // pred_region
    _
  $region17: #{discriminator_forward.1} parent=0 // pred_fallthru
    _
  // Predicated region
  $region18: #{discriminator_forward.1} parent=0 // pred_check
    _
  $region19: #{discriminator_forward.1} parent=0 // pred_check_branch
    %21 = sbr.rel (0) target = $region21
  $region20: #{discriminator_forward.1} parent=0 // pred_region
    _
  $region21: #{discriminator_forward.1} parent=0 // pred_fallthru
    _
  // Predicated region
  $region22: #{discriminator_forward.1} parent=0 // pred_check
    _
  $region23: #{discriminator_forward.1} parent=0 // pred_check_branch
    %23 = sbr.rel (0) target = $region25
  $region24: #{discriminator_forward.1} parent=0 // pred_region
    _
  $region25: #{discriminator_forward.1} parent=0 // pred_fallthru
    _
  // Predicated region
  $region26: #{discriminator_forward.1} parent=0 // pred_check
    _
  $region27: #{discriminator_forward.1} parent=0 // pred_check_branch
    %25 = sbr.rel (0) target = $region29
  $region28: #{discriminator_forward.1} parent=0 // pred_region
    _
  $region29: #{discriminator_forward.1} parent=0 // pred_fallthru
    _
  %v26 = vld [vmem:[%s0] sm:$0xff]
  %v27 = vld [vmem:[%s0 + $0x8] sm:$0xff]
  %v28 = vld [vmem:[%s1] sm:$0xff]
  %v29 = vld [vmem:[%s1 + $0x8] sm:$0xff]
  %v30 = vld [vmem:[%s1 + $0x10] sm:$0xff]
  %v31 = vld [vmem:[%s1 + $0x18] sm:$0xff]
  %v32 = vld [vmem:[%s1 + $0x20] sm:$0xff]
  %v33 = vld [vmem:[%s1 + $0x28] sm:$0xff]
  %v34 = vld [vmem:[%s1 + $0x30] sm:$0xff]
  %v35 = vld [vmem:[%s1 + $0x38] sm:$0xff]
  %v36 = vld [vmem:[%s1 + $0x40] sm:$0xff]
  %v37 = vld [vmem:[%s1 + $0x48] sm:$0xff]
  %v38 = vld [vmem:[%s1 + $0x50] sm:$0xff]
  %v39 = vld [vmem:[%s1 + $0x58] sm:$0xff]
  %v40 = vld [vmem:[%s1 + $0x60] sm:$0xff]
  %v41 = vld [vmem:[%s1 + $0x68] sm:$0xff]
  %v42 = vld [vmem:[%s1 + $0x70] sm:$0xff]
  %v43 = vld [vmem:[%s1 + $0x78] sm:$0xff]
  %v44 = vld [vmem:[%s1 + $0x80] sm:$0xff]
  %v45 = vld [vmem:[%s2] sm:$0x1]
  %v47 = vlaneseq
  %v48 = vshrl.u32 %v47, 7
  %v49 = vsub.s32 0, %v48
  %v50 = vrot.slane %v45, %v49
  %vm52 = vcmask 64512
  %v54 = vsel %vm52, %v27, 0
  %56 = vmatprep.subr.mxu0 0.0
  %57 = vmatpush1.msra.mxu0 %v28
  %58 = vmatprep.subr.mxu0 0.0
  %59 = vmatpush1.msra.mxu0 %v29
  %60 = vmatprep.subr.mxu0 0.0
  %61 = vmatpush1.msra.mxu0 %v30
  %62 = vmatprep.subr.mxu0 0.0
  %63 = vmatpush1.msra.mxu0 %v31
  %64 = vmatprep.subr.mxu0 0.0
  %65 = vmatpush1.msra.mxu0 %v32
  %66 = vmatprep.subr.mxu0 0.0
  %67 = vmatpush1.msra.mxu0 %v33
  %68 = vmatprep.subr.mxu0 0.0
  %69 = vmatpush1.msra.mxu0 %v34
  %70 = vmatprep.subr.mxu0 0.0
  %71 = vmatpush1.msra.mxu0 %v35
  %72 = vmatprep.subr.mxu0 0.0
  %73 = vmatpush1.msra.mxu0 %v36
  %74 = vmatprep.subr.mxu0 0.0
  %75 = vmatpush1.msra.mxu0 %v37
  %76 = vmatprep.subr.mxu0 0.0
  %77 = vmatpush1.msra.mxu0 %v38
  %78 = vmatprep.subr.mxu0 0.0
  %79 = vmatpush1.msra.mxu0 %v39
  %80 = vmatprep.subr.mxu0 0.0
  %81 = vmatpush1.msra.mxu0 %v40
  %82 = vmatprep.subr.mxu0 0.0
  %83 = vmatpush1.msra.mxu0 %v41
  %84 = vmatprep.subr.mxu0 0.0
  %85 = vmatpush1.msra.mxu0 %v42
  %86 = vmatprep.subr.mxu0 0.0
  %87 = vmatpush1.msra.mxu0 %v43
  %88 = vmatprep.subr.mxu0 0.0
  %89 = vmatpush1.msra.mxu0 %v44
  %90 = vmatprep.subr.mxu0 0.0
  %91 = vmatpush1.msra.mxu0 0.0
  %92 = vmatprep.subr.mxu0 0.0
  %93 = vmatpush1.msra.mxu0 0.0
  %94 = vmatprep.subr.mxu0 0.0
  %95 = vmatpush1.msra.mxu0 0.0
  %96 = vmatprep.subr.mxu0 0.0
  %97 = vmatpush1.msra.mxu0 0.0
  %98 = vmatprep.subr.mxu0 0.0
  %99 = vmatpush1.msra.mxu0 0.0
  %100 = vmatprep.subr.mxu0 0.0
  %101 = vmatpush1.msra.mxu0 0.0
  %102 = vmatprep.subr.mxu0 0.0
  %103 = vmatpush1.msra.mxu0 0.0
  %104 = vmatprep.subr.mxu0 0.0
  %105 = vmatpush1.msra.mxu0 0.0
  %106 = vmatprep.subr.mxu0 0.0
  %107 = vmatpush1.msra.mxu0 0.0
  %108 = vmatprep.subr.mxu0 0.0
  %109 = vmatpush1.msra.mxu0 0.0
  %110 = vmatprep.subr.mxu0 0.0
  %111 = vmatpush1.msra.mxu0 0.0
  %112 = vmatprep.subr.mxu0 0.0
  %113 = vmatpush1.msra.mxu0 0.0
  %114 = vmatprep.subr.mxu0 0.0
  %115 = vmatpush1.msra.mxu0 0.0
  %116 = vmatprep.subr.mxu0 0.0
  %117 = vmatpush1.msra.mxu0 0.0
  %118 = vmatprep.subr.mxu0 0.0
  %119 = vmatpush1.msra.mxu0 0.0
  %120 = vmatprep.mubr.f32.mxu0 %v54
  %121 = vmatmul.mubr.f32.gmra.mrb[0].mxu0 %v26
  %v122 = vpop.f32.mrb[0].mxu0
  %v123 = vadd.f32 %v50, %v122
  %v124 = vpop.f32.mrb[0].mxu0
  %125 = vdwg.mxu0
  %vm126 = vcmp.gt.f32.partialorder %v123, 0.0
  %v127 = vmul.f32 %v123, 0.2
  %v128 = vsel %vm126, %v123, %v127
  %v129 = vld [vmem:[%s3] sm:$0xff]
  %v130 = vld [vmem:[%s3 + $0x8] sm:$0xff]
  %v131 = vld [vmem:[%s3 + $0x10] sm:$0xff]
  %v132 = vld [vmem:[%s3 + $0x18] sm:$0xff]
  %v133 = vld [vmem:[%s3 + $0x20] sm:$0xff]
  %v134 = vld [vmem:[%s3 + $0x28] sm:$0xff]
  %v135 = vld [vmem:[%s3 + $0x30] sm:$0xff]
  %v136 = vld [vmem:[%s3 + $0x38] sm:$0xff]
  %v137 = vld [vmem:[%s3 + $0x40] sm:$0xff]
  %v138 = vld [vmem:[%s3 + $0x48] sm:$0xff]
  %v139 = vld [vmem:[%s3 + $0x50] sm:$0xff]
  %v140 = vld [vmem:[%s3 + $0x58] sm:$0xff]
  %v141 = vld [vmem:[%s3 + $0x60] sm:$0xff]
  %v142 = vld [vmem:[%s3 + $0x68] sm:$0xff]
  %v143 = vld [vmem:[%s3 + $0x70] sm:$0xff]
  %v144 = vld [vmem:[%s3 + $0x78] sm:$0xff]
  %v145 = vld [vmem:[%s4] sm:$0x1]
  %v147 = vlaneseq
  %v148 = vshrl.u32 %v147, 7
  %v149 = vsub.s32 0, %v148
  %v150 = vrot.slane %v145, %v149
  %152 = vmatprep.subr.mxu0 0.0
  %153 = vmatpush1.msra.mxu0 %v129
  %154 = vmatprep.subr.mxu0 0.0
  %155 = vmatpush1.msra.mxu0 %v130
  %156 = vmatprep.subr.mxu0 0.0
  %157 = vmatpush1.msra.mxu0 %v131
  %158 = vmatprep.subr.mxu0 0.0
  %159 = vmatpush1.msra.mxu0 %v132
  %160 = vmatprep.subr.mxu0 0.0
  %161 = vmatpush1.msra.mxu0 %v133
  %162 = vmatprep.subr.mxu0 0.0
  %163 = vmatpush1.msra.mxu0 %v134
  %164 = vmatprep.subr.mxu0 0.0
  %165 = vmatpush1.msra.mxu0 %v135
  %166 = vmatprep.subr.mxu0 0.0
  %167 = vmatpush1.msra.mxu0 %v136
  %168 = vmatprep.subr.mxu0 0.0
  %169 = vmatpush1.msra.mxu0 %v137
  %170 = vmatprep.subr.mxu0 0.0
  %171 = vmatpush1.msra.mxu0 %v138
  %172 = vmatprep.subr.mxu0 0.0
  %173 = vmatpush1.msra.mxu0 %v139
  %174 = vmatprep.subr.mxu0 0.0
  %175 = vmatpush1.msra.mxu0 %v140
  %176 = vmatprep.subr.mxu0 0.0
  %177 = vmatpush1.msra.mxu0 %v141
  %178 = vmatprep.subr.mxu0 0.0
  %179 = vmatpush1.msra.mxu0 %v142
  %180 = vmatprep.subr.mxu0 0.0
  %181 = vmatpush1.msra.mxu0 %v143
  %182 = vmatprep.subr.mxu0 0.0
  %183 = vmatpush1.msra.mxu0 %v144
  %184 = vmatprep.subr.mxu0 0.0
  %185 = vmatpush1.msra.mxu0 0.0
  %186 = vmatprep.subr.mxu0 0.0
  %187 = vmatpush1.msra.mxu0 0.0
  %188 = vmatprep.subr.mxu0 0.0
  %189 = vmatpush1.msra.mxu0 0.0
  %190 = vmatprep.subr.mxu0 0.0
  %191 = vmatpush1.msra.mxu0 0.0
  %192 = vmatprep.subr.mxu0 0.0
  %193 = vmatpush1.msra.mxu0 0.0
  %194 = vmatprep.subr.mxu0 0.0
  %195 = vmatpush1.msra.mxu0 0.0
  %196 = vmatprep.subr.mxu0 0.0
  %197 = vmatpush1.msra.mxu0 0.0
  %198 = vmatprep.subr.mxu0 0.0
  %199 = vmatpush1.msra.mxu0 0.0
  %200 = vmatprep.subr.mxu0 0.0
  %201 = vmatpush1.msra.mxu0 0.0
  %202 = vmatprep.subr.mxu0 0.0
  %203 = vmatpush1.msra.mxu0 0.0
  %204 = vmatprep.subr.mxu0 0.0
  %205 = vmatpush1.msra.mxu0 0.0
  %206 = vmatprep.subr.mxu0 0.0
  %207 = vmatpush1.msra.mxu0 0.0
  %208 = vmatprep.subr.mxu0 0.0
  %209 = vmatpush1.msra.mxu0 0.0
  %210 = vmatprep.subr.mxu0 0.0
  %211 = vmatpush1.msra.mxu0 0.0
  %212 = vmatprep.subr.mxu0 0.0
  %213 = vmatpush1.msra.mxu0 0.0
  %214 = vmatprep.subr.mxu0 0.0
  %215 = vmatpush1.msra.mxu0 0.0
  %216 = vmatprep.mubr.f32.mxu0 0.0
  %217 = vmatmul.mubr.f32.gmra.mrb[0].mxu0 %v128
  %v218 = vpop.f32.mrb[0].mxu0
  %v219 = vadd.f32 %v150, %v218
  %v220 = vpop.f32.mrb[0].mxu0
  %221 = vdwg.mxu0
  %vm222 = vcmp.gt.f32.partialorder %v219, 0.0
  %v223 = vmul.f32 %v219, 0.2
  %v224 = vsel %vm222, %v219, %v223
  %v225 = vld [vmem:[%s5] sm:$0xff]
  %v226 = vld [vmem:[%s5 + $0x8] sm:$0xff]
  %v227 = vld [vmem:[%s5 + $0x10] sm:$0xff]
  %v228 = vld [vmem:[%s5 + $0x18] sm:$0xff]
  %v229 = vld [vmem:[%s5 + $0x20] sm:$0xff]
  %v230 = vld [vmem:[%s5 + $0x28] sm:$0xff]
  %v231 = vld [vmem:[%s5 + $0x30] sm:$0xff]
  %v232 = vld [vmem:[%s5 + $0x38] sm:$0xff]
  %v233 = vld [vmem:[%s6] sm:$0x1]
  %v235 = vlaneseq
  %v236 = vshrl.u32 %v235, 7
  %v237 = vsub.s32 0, %v236
  %v238 = vrot.slane %v233, %v237
  %vm240 = vcmask 523264
  %v242 = vsel %vm240, %v224, 0
  %244 = vmatprep.subr.mxu0 0.0
  %245 = vmatpush1.msra.mxu0 %v225
  %246 = vmatprep.subr.mxu0 0.0
  %247 = vmatpush1.msra.mxu0 %v226
  %248 = vmatprep.subr.mxu0 0.0
  %249 = vmatpush1.msra.mxu0 %v227
  %250 = vmatprep.subr.mxu0 0.0
  %251 = vmatpush1.msra.mxu0 %v228
  %252 = vmatprep.subr.mxu0 0.0
  %253 = vmatpush1.msra.mxu0 %v229
  %254 = vmatprep.subr.mxu0 0.0
  %255 = vmatpush1.msra.mxu0 %v230
  %256 = vmatprep.subr.mxu0 0.0
  %257 = vmatpush1.msra.mxu0 %v231
  %258 = vmatprep.subr.mxu0 0.0
  %259 = vmatpush1.msra.mxu0 %v232
  %260 = vmatprep.subr.mxu0 0.0
  %261 = vmatpush1.msra.mxu0 0.0
  %262 = vmatprep.subr.mxu0 0.0
  %263 = vmatpush1.msra.mxu0 0.0
  %264 = vmatprep.subr.mxu0 0.0
  %265 = vmatpush1.msra.mxu0 0.0
  %266 = vmatprep.subr.mxu0 0.0
  %267 = vmatpush1.msra.mxu0 0.0
  %268 = vmatprep.subr.mxu0 0.0
  %269 = vmatpush1.msra.mxu0 0.0
  %270 = vmatprep.subr.mxu0 0.0
  %271 = vmatpush1.msra.mxu0 0.0
  %272 = vmatprep.subr.mxu0 0.0
  %273 = vmatpush1.msra.mxu0 0.0
  %274 = vmatprep.subr.mxu0 0.0
  %275 = vmatpush1.msra.mxu0 0.0
  %276 = vmatprep.subr.mxu0 0.0
  %277 = vmatpush1.msra.mxu0 0.0
  %278 = vmatprep.subr.mxu0 0.0
  %279 = vmatpush1.msra.mxu0 0.0
  %280 = vmatprep.subr.mxu0 0.0
  %281 = vmatpush1.msra.mxu0 0.0
  %282 = vmatprep.subr.mxu0 0.0
  %283 = vmatpush1.msra.mxu0 0.0
  %284 = vmatprep.subr.mxu0 0.0
  %285 = vmatpush1.msra.mxu0 0.0
  %286 = vmatprep.subr.mxu0 0.0
  %287 = vmatpush1.msra.mxu0 0.0
  %288 = vmatprep.subr.mxu0 0.0
  %289 = vmatpush1.msra.mxu0 0.0
  %290 = vmatprep.subr.mxu0 0.0
  %291 = vmatpush1.msra.mxu0 0.0
  %292 = vmatprep.subr.mxu0 0.0
  %293 = vmatpush1.msra.mxu0 0.0
  %294 = vmatprep.subr.mxu0 0.0
  %295 = vmatpush1.msra.mxu0 0.0
  %296 = vmatprep.subr.mxu0 0.0
  %297 = vmatpush1.msra.mxu0 0.0
  %298 = vmatprep.subr.mxu0 0.0
  %299 = vmatpush1.msra.mxu0 0.0
  %300 = vmatprep.subr.mxu0 0.0
  %301 = vmatpush1.msra.mxu0 0.0
  %302 = vmatprep.subr.mxu0 0.0
  %303 = vmatpush1.msra.mxu0 0.0
  %304 = vmatprep.subr.mxu0 0.0
  %305 = vmatpush1.msra.mxu0 0.0
  %306 = vmatprep.subr.mxu0 0.0
  %307 = vmatpush1.msra.mxu0 0.0
  %308 = vmatprep.mubr.f32.mxu0 0.0
  %309 = vmatmul.mubr.f32.gmra.mrb[0].mxu0 %v242
  %v310 = vpop.f32.mrb[0].mxu0
  %v311 = vadd.f32 %v238, %v310
  %v312 = vpop.f32.mrb[0].mxu0
  %313 = vdwg.mxu0
  %v314 = vsub.f32 0.0, %v311
  %v315 = vmul.f32 %v314, 1.442695
  %v316 = vpow.pop %v315
  %v317 = vadd.f32 %v316, 1.0
  %v318 = vrcp.pop %v317
  %319 = vst.msk [vmem:[%s7] sm:$0xff] %vm52, %v318
  // Predicated region
  $region30: #{discriminator_forward.1} parent=0 // pred_check
    _
  $region31: #{discriminator_forward.1} parent=0 // pred_check_branch
    %321 = sbr.rel (0) target = $region33
  $region32: #{discriminator_forward.1} parent=0 // pred_region
    _
  $region33: #{discriminator_forward.1} parent=0 // pred_fallthru
    _
  // Predicated region
  $region34: #{discriminator_forward.1} parent=0 // pred_check
    _
  $region35: #{discriminator_forward.1} parent=0 // pred_check_branch
    %323 = sbr.rel (0) target = $region37
  $region36: #{discriminator_forward.1} parent=0 // pred_region
    _
  $region37: #{discriminator_forward.1} parent=0 // pred_fallthru
    _

</llo_original>
